<compile_context>
chip_gen: v7x
topology: tpu7x:2x2x1
jax: 0.10.0
libtpu: 0.0.40
codegen_flags: <defaults>
</compile_context>

<pallas_src>
import math
from functools import partial

import numpy as np
import jax
import jax.numpy as jnp
from jax.experimental import pallas as pl
from jax.experimental.pallas import tpu as pltpu


# ----------------------------------------------------------------------------
# Linear (x @ w + b): weight VMEM-resident, rows tiled
# ----------------------------------------------------------------------------
def _linear_kernel(x_ref, w_ref, b_ref, o_ref):
    # bf16 MXU operands (no-op cast if already bf16), f32 accumulation, f32 bias add.
    acc = jnp.dot(x_ref[...].astype(jnp.bfloat16), w_ref[...].astype(jnp.bfloat16),
                  preferred_element_type=jnp.float32)
    o_ref[...] = (acc + b_ref[...].astype(jnp.float32)).astype(o_ref.dtype)


def linear_pallas(x, w, b, *, out_dtype=None, tm=512, tn=512):
    m, cin = x.shape
    cout = w.shape[1]
    out_dtype = out_dtype or x.dtype
    out_itemsize = jnp.dtype(out_dtype).itemsize
    tm = min(tm, m)
    b2 = b.reshape(1, cout)
    w_bytes = cin * cout * w.dtype.itemsize

    if w_bytes <= (8 << 20):
        # Weight + bias fully VMEM-resident across all row tiles (DMA'd once);
        # only the memory-bound activation / output streams are tiled and pipelined.
        grid = (pl.cdiv(m, tm),)
        in_specs = [
            pl.BlockSpec((tm, cin), lambda i: (i, 0)),
            pl.BlockSpec((cin, cout), lambda i: (0, 0)),
            pl.BlockSpec((1, cout), lambda i: (0, 0)),
        ]
        out_specs = pl.BlockSpec((tm, cout), lambda i: (i, 0))
        dims = ("parallel",)
        est = (2 * tm * cin * x.dtype.itemsize + 2 * w_bytes + 2 * cout * 4
               + 2 * tm * cout * out_itemsize)
    else:
        # Large weight: tile columns too, but keep columns OUTER so the weight block is
        # constant over the inner row sweep (exactly one full weight read in total).
        tn = min(tn, cout)
        grid = (pl.cdiv(cout, tn), pl.cdiv(m, tm))
        in_specs = [
            pl.BlockSpec((tm, cin), lambda j, i: (i, 0)),
            pl.BlockSpec((cin, tn), lambda j, i: (0, j)),
            pl.BlockSpec((1, tn), lambda j, i: (0, j)),
        ]
        out_specs = pl.BlockSpec((tm, tn), lambda j, i: (i, j))
        dims = ("parallel", "parallel")
        est = (2 * tm * cin * x.dtype.itemsize + 2 * cin * tn * w.dtype.itemsize
               + 2 * tn * 4 + 2 * tm * tn * out_itemsize)

    vmem_limit = int(min(max(2 * est, 16 << 20), 32 << 20))
    # TODO(synk): add pipeline_mode=pl.Buffered(3) on the activation spec if profiling
    #             shows exposed DMA after the larger row tile.
    return pl.pallas_call(
        _linear_kernel,
        out_shape=jax.ShapeDtypeStruct((m, cout), out_dtype),
        grid=grid,
        in_specs=in_specs,
        out_specs=out_specs,
        compiler_params=pltpu.CompilerParams(
            dimension_semantics=dims, vmem_limit_bytes=vmem_limit),
    )(x, w, b2)


def linear_ref(x, w, b, *, out_dtype=None):
    out_dtype = out_dtype or x.dtype
    acc = jnp.dot(x.astype(jnp.bfloat16), w.astype(jnp.bfloat16),
                  preferred_element_type=jnp.float32)
    return (acc + b.astype(jnp.float32)).astype(out_dtype)


# ----------------------------------------------------------------------------
# Per-patch attention with lane-dense in-kernel RoPE
# ----------------------------------------------------------------------------
def _attn_kernel(qkv_ref, cossin_ref, kmask_ref, o_ref, *,
                 num_heads, scale, patch_size, mxu_dtype):
    blk, three_c = qkv_ref.shape             # (SB*P, 3C)
    C = three_c // 3
    H = num_heads
    hd = C // H
    half = hd // 2
    C2 = C // 2
    P = patch_size
    SB = blk // P

    x = qkv_ref[...]                         # single packed DMA (bf16)
    # q/k columns arrive host-permuted: [all heads' first halves | second halves],
    # so the RoPE elementwise chain below runs lane-dense at width C/2.
    q1 = x[:, 0:C2].astype(jnp.float32)
    q2 = x[:, C2:C].astype(jnp.float32)
    k1 = x[:, C:C + C2].astype(jnp.float32)
    k2 = x[:, C + C2:2 * C].astype(jnp.float32)
    v = x[:, 2 * C:]                         # standard (head, hd) layout, stays bf16

    cs = cossin_ref[...].astype(jnp.float32)  # [blk, C] = [cos tiled over heads | sin tiled]
    cos_t = cs[:, :C2]
    sin_t = cs[:, C2:]

    # GPT-NeoX rotate-half RoPE (f32 on the VPU), softmax scale folded into q.
    qa = ((q1 * cos_t - q2 * sin_t) * scale).astype(mxu_dtype)
    qb = ((q1 * sin_t + q2 * cos_t) * scale).astype(mxu_dtype)
    ka = (k1 * cos_t - k2 * sin_t).astype(mxu_dtype)
    kb = (k1 * sin_t + k2 * cos_t).astype(mxu_dtype)

    # Merge the two half-width contractions into ONE full-hd contraction:
    # lane-axis concat of the rotated halves, then batch heads for the MXU dot.
    q_rot = jnp.concatenate([qa, qb], axis=-1)       # [blk, C], (2, H, half) column order
    k_rot = jnp.concatenate([ka, kb], axis=-1)

    def heads_from_perm(t):   # [blk, (2,H,half)] -> [SB*H, P, hd]
        t = t.reshape(blk, 2, H, half).transpose(0, 2, 1, 3)       # -> (blk, H, 2, half)
        return t.reshape(SB, P, H, hd).transpose(0, 2, 1, 3).reshape(SB * H, P, hd)

    def heads_from_std(t):    # [blk, (H,hd)] -> [SB*H, P, hd]
        return t.reshape(SB, P, H, hd).transpose(0, 2, 1, 3).reshape(SB * H, P, hd)

    qh = heads_from_perm(q_rot)
    kh = heads_from_perm(k_rot)
    vh = heads_from_std(v)

    # Single batched QK contraction of width hd (bf16 operands, f32 accumulation).
    scores = jnp.einsum("bqf,bkf->bqk", qh, kh,
                        preferred_element_type=jnp.float32)        # [SB*H, P, P]

    # Additive key mask precomputed host-side: 0 for valid keys, -1e30 for padded keys
    # / dummy patches.  Padded (duplicated) query rows attend normally and are dropped
    # by the output gather — intentional, do not mask queries here.
    kmask = kmask_ref[...].astype(jnp.float32).reshape(SB, 1, 1, P)
    scores = scores.reshape(SB, H, P, P) + kmask
    scores = scores - jnp.max(scores, axis=-1, keepdims=True)
    p = jnp.exp(scores)
    denom = jnp.sum(p, axis=-1, keepdims=True)                     # [SB, H, P, 1]

    out = jnp.einsum("bqk,bkd->bqd",
                     p.reshape(SB * H, P, P).astype(mxu_dtype), vh,
                     preferred_element_type=jnp.float32)           # [SB*H, P, hd]
    # Normalize AFTER the PV dot: reciprocal goes to the EUP and scales P*hd elements
    # instead of dividing the P*P probability matrix.
    out = out * pl.reciprocal(denom.reshape(SB * H, P, 1), approx=True)

    out = out.reshape(SB, H, P, hd).transpose(0, 2, 1, 3).reshape(blk, C)
    o_ref[...] = out.astype(o_ref.dtype)


def attention_pallas(qkv_pm, cossin, kmask, *, scale, patch_size, num_heads,
                     patches_per_block, mxu_dtype=jnp.bfloat16):
    rows, three_c = qkv_pm.shape
    C = three_c // 3
    P = patch_size
    H = num_heads
    SB = patches_per_block
    Sp = rows // P
    assert Sp % SB == 0
    blk = SB * P

    kernel = partial(_attn_kernel, num_heads=H, scale=scale, patch_size=P,
                     mxu_dtype=mxu_dtype)

    in_b = qkv_pm.dtype.itemsize
    est = (2 * blk * three_c * in_b        # qkv double buffer
           + 2 * blk * C * 4               # packed cos|sin double buffer
           + 2 * blk * 4                   # kmask
           + 2 * blk * C * in_b            # output double buffer
           + 16 * blk * C * 4              # RoPE / rotated / head-batched intermediates
           + 4 * SB * H * P * P * 4)       # scores + exp working set
    vmem_limit = int(min(max(2 * est, 16 << 20), 32 << 20))

    return pl.pallas_call(
        kernel,
        out_shape=jax.ShapeDtypeStruct((rows, C), qkv_pm.dtype),
        grid=(Sp // SB,),
        in_specs=[
            pl.BlockSpec((blk, three_c), lambda i: (i, 0)),
            pl.BlockSpec((blk, C), lambda i: (i, 0)),
            pl.BlockSpec((blk, 1), lambda i: (i, 0)),
        ],
        out_specs=pl.BlockSpec((blk, C), lambda i: (i, 0)),
        compiler_params=pltpu.CompilerParams(
            dimension_semantics=("parallel",),      # lets v7x shard patches on both TCs
            vmem_limit_bytes=vmem_limit),
    )(qkv_pm, cossin, kmask)


def attention_ref(qkv_pm, cossin, kmask, *, scale, patch_size, num_heads,
                  patches_per_block=None, mxu_dtype=jnp.bfloat16):
    del patches_per_block
    rows, three_c = qkv_pm.shape
    C = three_c // 3
    H = num_heads
    hd = C // H
    half = hd // 2
    C2 = C // 2
    P = patch_size
    Sp = rows // P

    x = qkv_pm.astype(jnp.float32)
    q1, q2 = x[:, :C2], x[:, C2:C]
    k1, k2 = x[:, C:C + C2], x[:, C + C2:2 * C]
    v = qkv_pm[:, 2 * C:].astype(mxu_dtype)

    cs = cossin.astype(jnp.float32)
    cos_t, sin_t = cs[:, :C2], cs[:, C2:]
    qa, qb = q1 * cos_t - q2 * sin_t, q1 * sin_t + q2 * cos_t
    ka, kb = k1 * cos_t - k2 * sin_t, k1 * sin_t + k2 * cos_t

    def heads(a, b):   # rotated halves [rows, (H, half)] -> [Sp, H, P, hd]
        t = jnp.concatenate([a.reshape(rows, H, 1, half),
                             b.reshape(rows, H, 1, half)], axis=2)
        return t.reshape(Sp, P, H, hd).transpose(0, 2, 1, 3)

    qr = heads(qa, qb).astype(mxu_dtype)
    kr = heads(ka, kb).astype(mxu_dtype)
    vr = v.reshape(Sp, P, H, hd).transpose(0, 2, 1, 3)

    scores = jnp.einsum("shqd,shkd->shqk", qr, kr,
                        preferred_element_type=jnp.float32) * scale
    scores = scores + kmask.reshape(Sp, 1, 1, P).astype(jnp.float32)
    p = jax.nn.softmax(scores, axis=-1)
    out = jnp.einsum("shqk,shkd->shqd", p.astype(mxu_dtype), vr,
                     preferred_element_type=jnp.float32)
    out = out.transpose(0, 2, 1, 3).reshape(rows, C)
    return out.astype(qkv_pm.dtype)


# ----------------------------------------------------------------------------
# Host-side index construction (port of torch get_padding_and_inverse)
# ----------------------------------------------------------------------------
def get_padding_and_inverse(offset, patch_size):
    offset = np.asarray(offset, np.int64)
    bincount = np.diff(np.concatenate([[0], offset]))
    bincount_pad = (bincount + patch_size - 1) // patch_size * patch_size
    mask_pad = bincount > patch_size
    bincount_pad = (~mask_pad) * bincount + mask_pad * bincount_pad
    _offset = np.concatenate([[0], offset])
    _offset_pad = np.concatenate([[0], np.cumsum(bincount_pad)])
    pad = np.arange(_offset_pad[-1])
    unpad = np.arange(_offset[-1])
    cu_seqlens = []
    for i in range(len(offset)):
        unpad[_offset[i]:_offset[i + 1]] += _offset_pad[i] - _offset[i]
        if bincount[i] != bincount_pad[i]:
            pad[_offset_pad[i + 1] - patch_size + bincount[i] % patch_size:_offset_pad[i + 1]] = \
                pad[_offset_pad[i + 1] - 2 * patch_size + bincount[i] % patch_size:
                    _offset_pad[i + 1] - patch_size]
        pad[_offset_pad[i]:_offset_pad[i + 1]] -= _offset_pad[i] - _offset[i]
        cu_seqlens.append(np.arange(_offset_pad[i], _offset_pad[i + 1],
                                    patch_size, dtype=np.int32))
    cu_seqlens.append(_offset_pad[-1:].astype(np.int32))
    cu_seqlens = np.concatenate(cu_seqlens)
    return pad, unpad, cu_seqlens, int(_offset_pad[-1])


def _rope_permute_cols(C, H):
    """Column permutation of the qkv projection: within each of the q and k blocks,
    reorder (head, half, j) -> (half, head, j) so rotate-half partners are lane-dense."""
    hd = C // H
    half = hd // 2
    base = np.arange(C).reshape(H, 2, half).transpose(1, 0, 2).reshape(C)
    return np.concatenate([base, base + C, np.arange(2 * C, 3 * C)]).astype(np.int32)


def _pick_patches_per_block(S, P, H):
    """Patches per grid step: batch enough patches to amortize the ~0.35us/step overhead
    (~512 query rows) while keeping the f32 scores/exp working set <= ~2 MiB so the block
    also fits v7x's smaller (64 MiB physical / 32 MiB scoped) VMEM budget."""
    sb = max(1, 512 // P)
    sb = min(sb, max(1, (2 << 20) // (4 * H * P * P)))
    sb = min(sb, S)
    if sb < S:
        m8 = 8 // math.gcd(8, P)   # keep (sb*P) % 8 == 0 for tiled (non-full) blocks
        sb = max(m8, (sb // m8) * m8)
    return sb


# ----------------------------------------------------------------------------
# Full forward
# ----------------------------------------------------------------------------
def path_attention_forward(params, feat, path_coord, path_inverse, path_offset,
                           position_embeddings, *, num_heads, patch_size,
                           use_pallas=True, mxu_dtype=jnp.bfloat16):
    del path_coord  # not used in the reference forward
    cos, sin = position_embeddings
    N, C = feat.shape
    H = num_heads
    hd = C // H
    assert hd % 2 == 0
    half = hd // 2
    scale = hd ** (-0.5)
    P = patch_size

    pad, unpad, cu_seqlens, npad = get_padding_and_inverse(path_offset, P)
    starts = cu_seqlens[:-1].astype(np.int64)
    lens = (cu_seqlens[1:] - cu_seqlens[:-1]).astype(np.int64)   # each <= patch_size
    S = starts.shape[0]
    SB = _pick_patches_per_block(S, P, H)
    Sp = ((S + SB - 1) // SB) * SB

    # ---- host-side index composition: one gather per tensor instead of a chain ----
    jcol = np.arange(P)
    row_idx = starts[:, None] + np.minimum(jcol[None, :], lens[:, None] - 1)  # [S, P]
    row_idx_full = np.zeros((Sp, P), np.int64)
    row_idx_full[:S] = row_idx                      # dummy patches point at padded row 0
    row_idx_full = row_idx_full.reshape(-1)
    idx_cs = pad[row_idx_full]                      # patch-major -> path point (M)
    idx_in = np.asarray(path_inverse, np.int64)[idx_cs]            # -> feat row (N)

    patch_of_p = np.repeat(np.arange(S), lens)
    p2p = patch_of_p * P + (np.arange(npad) - starts[patch_of_p])  # padded -> patch-major
    idx_out = p2p[unpad]                                           # [M]

    # additive key mask: 0 for valid keys, -1e30 for padded keys / dummy patches
    kmask_np = np.full((Sp, P), -1e30, np.float32)
    kmask_np[:S] = np.where(jcol[None, :] < lens[:, None], 0.0, -1e30)
    kmask = jnp.asarray(kmask_np.reshape(Sp * P, 1))

    idx_in_j = jnp.asarray(idx_in, jnp.int32)
    idx_cs_j = jnp.asarray(idx_cs, jnp.int32)
    idx_out_j = jnp.asarray(idx_out, jnp.int32)
    inv_j = jnp.asarray(path_inverse, jnp.int32)

    # Permute qkv projection columns for lane-dense RoPE; weights pre-cast to bf16
    # (MXU operands), biases stay f32 (added to the f32 accumulator).
    perm = jnp.asarray(_rope_permute_cols(C, H))
    w_qkv = jnp.take(params["w_qkv"], perm, axis=1).astype(mxu_dtype)
    b_qkv = jnp.take(params["b_qkv"], perm, axis=0)
    w_proj = params["w_proj"].astype(mxu_dtype)
    b_proj = params["b_proj"]

    lin = linear_pallas if use_pallas else linear_ref
    attn = attention_pallas if use_pallas else attention_ref

    qkv = lin(feat, w_qkv, b_qkv, out_dtype=mxu_dtype)      # [N, 3C] bf16 (permuted q/k cols)
    # TODO(synk): fuse this gather into the attention kernel via scalar-prefetched row
    #             indices + manual DMA; bf16 already halves the gathered traffic.
    qkv_pm = jnp.take(qkv, idx_in_j, axis=0)                # [Sp*P, 3C]

    # One wide packed side input: [cos tiled over heads | sin tiled over heads] -> [rows, C]
    cos_g = jnp.take(cos[:, :half], idx_cs_j, axis=0)
    sin_g = jnp.take(sin[:, :half], idx_cs_j, axis=0)
    cossin = jnp.concatenate([jnp.tile(cos_g, (1, H)), jnp.tile(sin_g, (1, H))],
                             axis=1).astype(jnp.float32)

    out_pm = attn(qkv_pm, cossin, kmask, scale=scale, patch_size=P,
                  num_heads=H, patches_per_block=SB, mxu_dtype=mxu_dtype)   # [Sp*P, C]

    out = jnp.take(out_pm, idx_out_j, axis=0)               # [M, C]  single fused gather
    out = lin(out, w_proj, b_proj, out_dtype=feat.dtype)    # [M, C] back to f32
    # attn_drop / proj_drop are identity (p = 0.0 / eval mode)

    # torch_scatter.scatter(..., reduce='mean') over path_inverse
    sums = jnp.zeros((N, C), out.dtype).at[inv_j].add(out)
    cnt = jnp.zeros((N,), out.dtype).at[inv_j].add(1.0)
    return sums / jnp.maximum(cnt, 1.0)[:, None]


# ----------------------------------------------------------------------------
if __name__ == "__main__":
    C, H, P = 32, 4, 8          # channels, num_heads, patch_size
    hd = C // H
    N = 20                      # number of points
    seg_lens = [10, 13, 5]      # path segment lengths (tests padding + short patch)
    M = sum(seg_lens)
    path_offset = np.cumsum(seg_lens).astype(np.int64)

    key = jax.random.PRNGKey(0)
    k_feat, k_wq, k_bq, k_wp, k_bp = jax.random.split(key, 5)
    feat = jax.random.normal(k_feat, (N, C), jnp.float32)
    params = {
        "w_qkv": 0.1 * jax.random.normal(k_wq, (C, 3 * C), jnp.float32),
        "b_qkv": 0.1 * jax.random.normal(k_bq, (3 * C,), jnp.float32),
        "w_proj": 0.1 * jax.random.normal(k_wp, (C, C), jnp.float32),
        "b_proj": 0.1 * jax.random.normal(k_bp, (C,), jnp.float32),
    }

    # path_inverse: indices into feat (built entirely in writable numpy)
    rng = np.random.RandomState(0)
    extra = rng.randint(0, N, size=M - N)
    path_inverse = np.concatenate([np.arange(N), extra]).astype(np.int32)
    rng.shuffle(path_inverse)

    # rotary position embeddings per path point: [M, head_dim]
    pos = np.arange(M, dtype=np.float32)[:, None]
    inv_freq = 1.0 / (10000.0 ** (np.arange(0, hd, 2, dtype=np.float32) / hd))
    ang = pos * inv_freq[None, :]
    ang = np.concatenate([ang, ang], axis=-1)
    cos = jnp.asarray(np.cos(ang), jnp.float32)
    sin = jnp.asarray(np.sin(ang), jnp.float32)
    path_coord = jnp.zeros((M, 3), jnp.float32)   # unused by forward

    out = path_attention_forward(params, feat, path_coord, path_inverse, path_offset,
                                 (cos, sin), num_heads=H, patch_size=P, use_pallas=True)
    out = jax.block_until_ready(out)

    ref = path_attention_forward(params, feat, path_coord, path_inverse, path_offset,
                                 (cos, sin), num_heads=H, patch_size=P, use_pallas=False)
    ref = jax.block_until_ready(ref)

    err = float(np.max(np.abs(np.asarray(out) - np.asarray(ref))))
    assert np.allclose(np.asarray(out), np.asarray(ref), atol=2e-2, rtol=2e-2), err
    print("KERNEL_OK")
</pallas_src>

<mosaic_0001>
module attributes {stable_mosaic.version = 11 : i64} {
  func.func @_linear_kernel(%arg0: i32, %arg1: memref<20x32xf32, #tpu.memory_space<vmem>>, %arg2: memref<32x96xbf16, #tpu.memory_space<vmem>>, %arg3: memref<1x96xf32, #tpu.memory_space<vmem>>, %arg4: memref<20x96xbf16, #tpu.memory_space<vmem>>) attributes {dimension_semantics = [#tpu.dimension_semantics<parallel>], iteration_bounds = array<i64: 1>, scalar_prefetch = 0 : i64, scratch_operands = 0 : i64, tpu.core_type = #tpu.core_type<tc>, window_params = [{transform_indices = @transform_0, window_bounds = array<i64: 20, 32>}, {pipeline_mode = #tpu.pipeline_mode<synchronous>, transform_indices = @transform_1, window_bounds = array<i64: 32, 96>}, {pipeline_mode = #tpu.pipeline_mode<synchronous>, transform_indices = @transform_2, window_bounds = array<i64: 1, 96>}, {transform_indices = @transform_3, window_bounds = array<i64: 20, 96>}]} {
    %c0 = arith.constant 0 : index
    %c0_0 = arith.constant 0 : index
    %0 = vector.load %arg1[%c0, %c0_0] : memref<20x32xf32, #tpu.memory_space<vmem>>, vector<20x32xf32>
    %1 = arith.truncf %0 : vector<20x32xf32> to vector<20x32xbf16>
    %c0_1 = arith.constant 0 : index
    %c0_2 = arith.constant 0 : index
    %2 = vector.load %arg2[%c0_1, %c0_2] : memref<32x96xbf16, #tpu.memory_space<vmem>>, vector<32x96xbf16>
    %cst = arith.constant dense<0.000000e+00> : vector<20x96xf32>
    %3 = tpu.matmul %1, %2, %cst {dimension_numbers = #tpu.dot_dimension_numbers<[1], [0], [0], [1], [0, 0, 1, 1], [], []>} : vector<20x32xbf16>, vector<32x96xbf16>, vector<20x96xf32> -> vector<20x96xf32>
    %c0_3 = arith.constant 0 : index
    %c0_4 = arith.constant 0 : index
    %4 = vector.load %arg3[%c0_3, %c0_4] : memref<1x96xf32, #tpu.memory_space<vmem>>, vector<1x96xf32>
    %5 = vector.broadcast %4 : vector<1x96xf32> to vector<20x96xf32>
    %6 = arith.addf %3, %5 : vector<20x96xf32>
    %7 = arith.truncf %6 : vector<20x96xf32> to vector<20x96xbf16>
    %c0_5 = arith.constant 0 : index
    %c0_6 = arith.constant 0 : index
    %8 = vector.load %arg4[%c0_5, %c0_6] : memref<20x96xbf16, #tpu.memory_space<vmem>>, vector<20x96xbf16>
    tpu.vector_store %arg4[%c0_5, %c0_6], %7 {strides = array<i32>} : memref<20x96xbf16, #tpu.memory_space<vmem>>, vector<20x96xbf16>,
    return
  }
  func.func @transform_0(%arg0: i32) -> (i32, i32) {
    %c0_i32 = arith.constant 0 : i32
    %c0_i32_0 = arith.constant 0 : i32
    return %arg0, %c0_i32 : i32, i32
  }
  func.func @transform_1(%arg0: i32) -> (i32, i32) {
    %c0_i32 = arith.constant 0 : i32
    %c0_i32_0 = arith.constant 0 : i32
    %c0_i32_1 = arith.constant 0 : i32
    return %c0_i32, %c0_i32_0 : i32, i32
  }
  func.func @transform_2(%arg0: i32) -> (i32, i32) {
    %c0_i32 = arith.constant 0 : i32
    %c0_i32_0 = arith.constant 0 : i32
    %c0_i32_1 = arith.constant 0 : i32
    return %c0_i32, %c0_i32_0 : i32, i32
  }
  func.func @transform_3(%arg0: i32) -> (i32, i32) {
    %c0_i32 = arith.constant 0 : i32
    %c0_i32_0 = arith.constant 0 : i32
    return %arg0, %c0_i32 : i32, i32
  }
}

</mosaic_0001>

<llo_original>
// kernel: tpu_custom_call.1
$region0: #{tpu_custom_call.1}
  #allocation0 [shape = 'u32[]', space=smem, size = 0x4, offset = 0x4, fixed_abs, tag = 'smem constant byte address 0x4 - core index']
  #allocation1 [shape = 'u32[144,128]{1,0:T(1,128)}', space=vmem, size = 0x12000, scoped, tag = 'internal scratch']
  %s0 = inlined_call_operand.hbm [shape: f32[20,32], index: 0, kind: input, shape index: {}]
  %s1 = inlined_call_operand.hbm [shape: bf16[32,96], index: 1, kind: input, shape index: {}]
  %s2 = inlined_call_operand.vmem [shape: f32[1,96], index: 2, kind: input, shape index: {}]
  %s3 = inlined_call_operand.hbm [shape: bf16[20,96], index: 3, kind: output, shape index: {}]
  %s4 = sld [smem:[#allocation0]]
  $region30: #{tpu_custom_call.1} parent=0
    _
  %s6 = ssub.s32 1, %s4
  %s7 = scalar_select 0, %s6, %s4
  $region1: #{tpu_custom_call.1} parent=0
    #allocation2 [shape = 'u8[12288]{0}', space=vmem, size = 0x3000, scoped, tag = 'input window, operand 0, single buffered']
    #allocation3 [shape = 's32[1]{0}', space=sflag, size = 0x4, scoped, tag = 'scoped memory for tpu_custom_call.1']
    #allocation4 [shape = 's32[1]{0}', space=sflag, size = 0x4, scoped, tag = 'scoped memory for tpu_custom_call.1']
    #allocation5 [shape = 'u8[8192]{0}', space=vmem, size = 0x2000, scoped, tag = 'input window, operand 1, single buffered']
    #allocation6 [shape = 's32[1]{0}', space=sflag, size = 0x4, scoped, tag = 'scoped memory for tpu_custom_call.1']
    #allocation7 [shape = 'u8[6144]{0}', space=vmem, size = 0x1800, scoped, tag = 'output window, operand 0, single buffered']
    %8 = vsyncpa [#allocation3], 0
    %9 = vsyncpa [#allocation6], 0
    %10 = vsyncpa [#allocation4], 0
    // Predicated region
    $region2: #{tpu_custom_call.1} parent=1 // pred_check
      _
    $region3: #{tpu_custom_call.1} parent=1 // pred_check_branch
      %12 = sbr.rel (0) target = $region5
    $region4: #{tpu_custom_call.1} parent=1 // pred_region
      %s14 = ssub.s32 384, 384
      %15 = vsyncadd [#allocation3], %s14
      %s16 = sshll.u32 [#allocation2], 4
      %s17 = int_to_ptr.vmem [resolvable:$true] %s16
      %22 = dma.hbm_to_vmem [thread:$0]  %s0, 384, %s17, [#allocation3], 128, 128, 8
    $region5: #{tpu_custom_call.1} parent=1 // pred_fallthru
      _
    // Predicated region
    $region6: #{tpu_custom_call.1} parent=1 // pred_check
      _
    $region7: #{tpu_custom_call.1} parent=1 // pred_check_branch
      %24 = sbr.rel (0) target = $region9
    $region8: #{tpu_custom_call.1} parent=1 // pred_region
      %s26 = ssub.s32 256, 256
      %27 = vsyncadd [#allocation6], %s26
      %s28 = sshll.u32 [#allocation5], 4
      %s29 = int_to_ptr.vmem [resolvable:$true] %s28
      %34 = dma.hbm_to_vmem [thread:$0]  %s1, 256, %s29, [#allocation6], 64, 64, 4
    $region9: #{tpu_custom_call.1} parent=1 // pred_fallthru
      _
    // Predicated region
    $region10: #{tpu_custom_call.1} parent=1 // pred_check
      _
    $region11: #{tpu_custom_call.1} parent=1 // pred_check_branch
      %36 = sbr.rel (0) target = $region13
    $region12: #{tpu_custom_call.1} parent=1 // pred_region
      _
    $region13: #{tpu_custom_call.1} parent=1 // pred_fallthru
      _
    // Predicated region
    $region14: #{tpu_custom_call.1} parent=1 // pred_check
      _
    $region15: #{tpu_custom_call.1} parent=1 // pred_check_branch
      %38 = sbr.rel (0) target = $region17
    $region16: #{tpu_custom_call.1} parent=1 // pred_region
      %39 = dma.done [#allocation3], 384
    $region17: #{tpu_custom_call.1} parent=1 // pred_fallthru
      _
    // Predicated region
    $region18: #{tpu_custom_call.1} parent=1 // pred_check
      _
    $region19: #{tpu_custom_call.1} parent=1 // pred_check_branch
      %41 = sbr.rel (0) target = $region21
    $region20: #{tpu_custom_call.1} parent=1 // pred_region
      %42 = dma.done [#allocation6], 256
    $region21: #{tpu_custom_call.1} parent=1 // pred_fallthru
      _
    %v44 = vld [vmem:[#allocation2] sm:$0xff]
    %v45 = vld [vmem:[#allocation2 + $0x8] sm:$0xff]
    %v46 = vld [vmem:[#allocation2 + $0x10] sm:$0xf]
    %v47 = vpack.c.bf16 %v45, %v44
    %v48 = vpack.c.bf16 %v46, %v46
    %v49 = vld [vmem:[#allocation5] sm:$0xf]
    %v50 = vld [vmem:[#allocation5 + $0x4] sm:$0xf]
    %v51 = vld [vmem:[#allocation5 + $0x8] sm:$0xf]
    %v52 = vld [vmem:[#allocation5 + $0xc] sm:$0xf]
    %v53 = vld [vmem:[%s2] sm:$0x1]
    %v55 = vlaneseq
    %v56 = vshrl.u32 %v55, 7
    %v57 = vsub.s32 0, %v56
    %v58 = vrot.slane %v53, %v57
    %v64 = vunpack.c.l.b16 %v49
    %v65 = vunpack.c.l.b16 %v50
    %v66 = vunpack.c.l.b16 %v51
    %v67 = vunpack.c.l.b16 %v52
    %v68 = vpack.c.b16 %v65, %v64
    %v69 = vpack.c.b16 %v67, %v66
    %vm72 = vcmask 261120
    %v74 = vsel %vm72, %v47, 0
    %v77 = vsel %vm72, %v48, 0
    %79 = vmatprep.subr.bf16.mxu0 0
    %80 = vmatpush1.bf16.msra.mxu0 %v68
    %81 = vmatprep.subr.bf16.mxu0 0
    %82 = vmatpush1.bf16.msra.mxu0 %v69
    %83 = vmatprep.subr.bf16.mxu0 0
    %84 = vmatpush1.bf16.msra.mxu0 0
    %85 = vmatprep.subr.bf16.mxu0 0
    %86 = vmatpush1.bf16.msra.mxu0 0
    %87 = vmatprep.subr.bf16.mxu0 0
    %88 = vmatpush1.bf16.msra.mxu0 0
    %89 = vmatprep.subr.bf16.mxu0 0
    %90 = vmatpush1.bf16.msra.mxu0 0
    %91 = vmatprep.subr.bf16.mxu0 0
    %92 = vmatpush1.bf16.msra.mxu0 0
    %93 = vmatprep.subr.bf16.mxu0 0
    %94 = vmatpush1.bf16.msra.mxu0 0
    %95 = vmatprep.subr.bf16.mxu0 0
    %96 = vmatpush1.bf16.msra.mxu0 0
    %97 = vmatprep.subr.bf16.mxu0 0
    %98 = vmatpush1.bf16.msra.mxu0 0
    %99 = vmatprep.subr.bf16.mxu0 0
    %100 = vmatpush1.bf16.msra.mxu0 0
    %101 = vmatprep.subr.bf16.mxu0 0
    %102 = vmatpush1.bf16.msra.mxu0 0
    %103 = vmatprep.subr.bf16.mxu0 0
    %104 = vmatpush1.bf16.msra.mxu0 0
    %105 = vmatprep.subr.bf16.mxu0 0
    %106 = vmatpush1.bf16.msra.mxu0 0
    %107 = vmatprep.subr.bf16.mxu0 0
    %108 = vmatpush1.bf16.msra.mxu0 0
    %109 = vmatprep.subr.bf16.mxu0 0
    %110 = vmatpush1.bf16.msra.mxu0 0
    %111 = vmatprep.mubr.bf16.mxu0 0
    %112 = vmatmul.mubr.bf16.gmra.mrb[0].mxu0 %v74
    %v113 = vpop.f32.mrb[0].mxu0
    %v114 = vadd.f32 %v58, %v113
    %v115 = vpop.f32.mrb[0].mxu0
    %v116 = vpop.f32.mrb[0].mxu0
    %v117 = vadd.f32 %v58, %v116
    %v118 = vpop.f32.mrb[0].mxu0
    %119 = vmatprep.mubr.bf16.mxu0 0
    %120 = vmatmul.mubr.bf16.gmra.mrb[0].mxu0 %v77
    %v121 = vpop.f32.mrb[0].mxu0
    %v122 = vadd.f32 %v58, %v121
    %v123 = vpop.f32.mrb[0].mxu0
    %v124 = vpop.f32.mrb[0].mxu0
    %v125 = vpop.f32.mrb[0].mxu0
    %126 = vdwg.mxu0
    %v127 = vpack.c.bf16 %v117, %v114
    %v128 = vpack.c.bf16 %v122, %v122
    %v131 = vunpack.c.l.b16 %v127
    %v132 = vunpack.c.h.b16 %v127
    %v133 = vunpack.c.l.b16 %v128
    %v134 = vpack.c.b16 %v131, %v131
    %v135 = vpack.c.b16 %v132, %v132
    %v136 = vpack.c.b16 %v133, %v133
    %vm140 = vcmask 781312
    %141 = vst.msk [vmem:[#allocation7] sm:$0xf] %vm140, %v134
    %142 = vst.msk [vmem:[#allocation7 + $0x4] sm:$0xf] %vm140, %v135
    %vm143 = vcmask 779264
    %144 = vst.msk [vmem:[#allocation7 + $0x8] sm:$0x3] %vm143, %v136
    // Predicated region
    $region22: #{tpu_custom_call.1} parent=1 // pred_check
      _
    $region23: #{tpu_custom_call.1} parent=1 // pred_check_branch
      %146 = sbr.rel (0) target = $region25
    $region24: #{tpu_custom_call.1} parent=1 // pred_region
      %s148 = ssub.s32 192, 192
      %149 = vsyncadd [#allocation4], %s148
      %s150 = sshll.u32 [#allocation7], 4
      %s151 = int_to_ptr.vmem [resolvable:$true] %s150
      %156 = dma.vmem_to_hbm [thread:$0]  %s151, 192, %s3, [#allocation4], 64, 64, 4
    $region25: #{tpu_custom_call.1} parent=1 // pred_fallthru
      _
    // Predicated region
    $region26: #{tpu_custom_call.1} parent=1 // pred_check
      _
    $region27: #{tpu_custom_call.1} parent=1 // pred_check_branch
      %158 = sbr.rel (0) target = $region29
    $region28: #{tpu_custom_call.1} parent=1 // pred_region
      %159 = dma.done [#allocation4], 192
    $region29: #{tpu_custom_call.1} parent=1 // pred_fallthru
      _
    %160 = vsyncpa [#allocation3], 1
    %161 = vsyncpa [#allocation6], 1
    %162 = vsyncpa [#allocation4], 1

</llo_original>
